<compile_context>
chip_gen: v6e
topology: v6e:2x2x1
jax: 0.10.0
libtpu: 0.0.40
codegen_flags: <defaults>
</compile_context>

<pallas_src>
import math

import jax
import jax.numpy as jnp
from jax.experimental import pallas as pl
from jax.experimental.pallas import tpu as pltpu


# ---------------------------------------------------------------------------
# PyTorch __init__ buffer reproduction
# ---------------------------------------------------------------------------
def make_positional_encoding(d_model: int, max_len: int = 1000,
                             dtype=jnp.float32) -> jnp.ndarray:
    """pe buffer of shape (max_len, d_model), identical to the torch code."""
    pos = jnp.arange(0, max_len, dtype=jnp.float32)[:, None]            # (max_len, 1)
    div = jnp.exp(jnp.arange(0, d_model, 2, dtype=jnp.float32)
                  * -(math.log(10000.0) / d_model))                     # (d_model//2,)
    pe = jnp.zeros((max_len, d_model), dtype=jnp.float32)
    pe = pe.at[:, 0::2].set(jnp.sin(pos * div))
    pe = pe.at[:, 1::2].set(jnp.cos(pos * div))
    return pe.astype(dtype)


# ---------------------------------------------------------------------------
# Kernel body: plain (broadcast-compatible) add.
#   main path:     x tile (tb, tc) + pe tile (tb, tc)  -> same-shape add
#   fallback path: x tile (tb, tc) + pe tile (1,  tc)  -> sublane broadcast
#     (micro-opt possible via pe_ref[pl.ds(0, tb, stride=0), :]; not needed
#      while the kernel is HBM/DMA-bound)
# ---------------------------------------------------------------------------
def _add_pe_kernel(x_ref, pe_ref, o_ref):
    o_ref[...] = (x_ref[...] + pe_ref[...]).astype(o_ref.dtype)


# ---------------------------------------------------------------------------
# Tiling helpers
# ---------------------------------------------------------------------------
_LANE = 128


def _sublane_quantum(dtype) -> int:
    """Rows per full vreg sublane group for this dtype."""
    return {4: 8, 2: 16, 1: 32}.get(jnp.dtype(dtype).itemsize, 8)


def _device_kind() -> str:
    try:
        return jax.devices()[0].device_kind.lower()
    except Exception:
        return ""


def _target_block_bytes() -> int:
    kind = _device_kind()
    if "v7" in kind:
        return 6 * 1024 * 1024   # bigger blocks; 3.2 TB/s HBM hides step overhead
    if "v6" in kind:
        return 4 * 1024 * 1024
    return 2 * 1024 * 1024       # v5e / unknown: already <5% step overhead


def _is_dual_core() -> bool:
    return "v7" in _device_kind()   # 2 TensorCores per chip


def _pick_col_tile(C: int, bytes_per_col: int, target_bytes: int) -> int:
    """Column tile: full extent if it fits the target, else the largest
    lane-aligned divisor of C (no masked tail), else a lane-aligned tile with
    one masked tail block."""
    if C * bytes_per_col <= target_bytes:
        return C
    max_cols = max(_LANE, (target_bytes // max(bytes_per_col, 1)) // _LANE * _LANE)
    if max_cols >= C:
        return C
    t = (min(max_cols, C) // _LANE) * _LANE
    while t >= _LANE:
        if C % t == 0:
            return t
        t -= _LANE
    return max_cols


# ---------------------------------------------------------------------------
# Forward wrapper
# ---------------------------------------------------------------------------
def positional_encoding_forward(x: jnp.ndarray, pe: jnp.ndarray,
                                *, donate_x: bool = False) -> jnp.ndarray:
    """x: (B, S, D);  pe: (max_len, D).  Returns x + pe[:S] (broadcast over B)."""
    B, S, D = x.shape
    max_len, d_pe = pe.shape
    if S > max_len:
        raise ValueError(f"sequence length {S} exceeds positional-encoding "
                         f"max_len {max_len}")
    if d_pe != D:
        raise ValueError(f"d_model mismatch: x has {D}, pe has {d_pe}")

    # Match PyTorch promotion (e.g. bf16 x + f32 buffer -> f32 result).
    out_dtype = jnp.result_type(x.dtype, pe.dtype)
    isz_x = jnp.dtype(x.dtype).itemsize
    isz_o = jnp.dtype(out_dtype).itemsize
    isz_max = max(isz_x, isz_o)

    quantum = _sublane_quantum(x.dtype)
    target = _target_block_bytes()
    pe_s = pe[:S, :].astype(out_dtype)

    if S >= quantum and S % quantum == 0:
        # ------------------- main path: sublane-dense fold --------------------
        # (B, S, D) -> (B*q, (S/q)*D); pe -> (q, (S/q)*D); same-shape tiles.
        S1 = quantum
        C = (S // S1) * D
        x2 = x.reshape(B * S1, C)
        pe2 = pe_s.reshape(S1, C)

        per_batch_bytes = S1 * C * isz_max
        if per_batch_bytes >= target:
            m = 1
            tc = _pick_col_tile(C, S1 * isz_max, target)
        else:
            # Pack several batch elements per row block; prefer m | B so the
            # last row block is not a masked partial tile.
            m_cap = max(1, min(B, target // max(per_batch_bytes, 1)))
            m = m_cap
            while m > 1 and B % m != 0:
                m -= 1
            if m < max(1, m_cap // 2):
                m = m_cap          # B has no nearby divisor: accept a tail block
            tc = C
        tb = m * S1
        if m > 1:
            pe2 = jnp.tile(pe2, (m, 1))     # tiny one-time HBM cost (<= target)

        rows = B * S1
        row_blocks = pl.cdiv(rows, tb)
        col_blocks = pl.cdiv(C, tc)

        # v7x: never leave the second TensorCore idle on a decently sized input.
        if (_is_dual_core() and row_blocks * col_blocks == 1
                and rows * C * isz_x >= (1 << 20) and C >= 2 * _LANE):
            tc = _pick_col_tile(C, tb * isz_max,
                                max(tb * isz_max * _LANE, (tb * C * isz_max) // 2))
            col_blocks = pl.cdiv(C, tc)

        grid = (col_blocks, row_blocks)     # rows innermost -> pe DMA'd once/col
        x_spec = pl.BlockSpec((tb, tc), lambda c, r: (r, c))
        pe_spec = pl.BlockSpec((tb, tc), lambda c, r: (0, c))
        o_spec = pl.BlockSpec((tb, tc), lambda c, r: (r, c))
        pe_block_rows = tb
        out_rows, out_cols = rows, C
    else:
        # --------------- fallback: (B, S*D) with broadcast pe tile ------------
        F = S * D
        x2 = x.reshape(B, F)
        pe2 = pe_s.reshape(1, F)
        tb = B if B <= quantum else quantum
        tc = _pick_col_tile(F, tb * isz_max, target)
        grid = (pl.cdiv(F, tc), pl.cdiv(B, tb))
        x_spec = pl.BlockSpec((tb, tc), lambda c, r: (r, c))
        pe_spec = pl.BlockSpec((1, tc), lambda c, r: (0, c))
        o_spec = pl.BlockSpec((tb, tc), lambda c, r: (r, c))
        pe_block_rows = quantum            # (1, tc) may be sublane-padded in VMEM
        out_rows, out_cols = B, F

    # Explicit VMEM budget: double-buffered x + out + pe blocks, plus headroom.
    blk_x = tb * tc * isz_x
    blk_o = tb * tc * isz_o
    blk_pe = pe_block_rows * tc * isz_o
    vmem_limit = 2 * (blk_x + blk_o + blk_pe) + (2 << 20)
    vmem_limit = min(max(vmem_limit, 16 << 20), 48 << 20)

    io_aliases = {0: 0} if (donate_x and x.dtype == out_dtype) else {}

    out2 = pl.pallas_call(
        _add_pe_kernel,
        out_shape=jax.ShapeDtypeStruct((out_rows, out_cols), out_dtype),
        grid_spec=pltpu.PrefetchScalarGridSpec(
            num_scalar_prefetch=0,
            grid=grid,
            in_specs=[x_spec, pe_spec],
            out_specs=o_spec,
        ),
        compiler_params=pltpu.CompilerParams(
            dimension_semantics=("parallel", "parallel"),
            vmem_limit_bytes=vmem_limit,
        ),
        input_output_aliases=io_aliases,
    )(x2, pe2)

    return out2.reshape(B, S, D)


# ---------------------------------------------------------------------------
# Demo / correctness check
# ---------------------------------------------------------------------------
if __name__ == "__main__":
    key = jax.random.PRNGKey(0)
    B, S, D = 2, 8, 32
    max_len = 1000

    x = jax.random.normal(key, (B, S, D), dtype=jnp.float32)
    pe = make_positional_encoding(D, max_len)

    out = positional_encoding_forward(x, pe)
    out = jax.block_until_ready(out)

    # Plain-JAX reference (same semantics as the PyTorch forward).
    ref = x + pe[:S, :][None, :, :]
    assert out.shape == (B, S, D)
    assert out.dtype == ref.dtype
    assert jnp.allclose(out, ref, atol=1e-6, rtol=1e-6)

    print("KERNEL_OK")
</pallas_src>

<mosaic_0001>
module attributes {stable_mosaic.version = 11 : i64} {
  func.func @_add_pe_kernel(%arg0: i32, %arg1: i32, %arg2: memref<16x32xf32, #tpu.memory_space<vmem>>, %arg3: memref<16x32xf32, #tpu.memory_space<vmem>>, %arg4: memref<16x32xf32, #tpu.memory_space<vmem>>) attributes {dimension_semantics = [#tpu.dimension_semantics<parallel>, #tpu.dimension_semantics<parallel>], iteration_bounds = array<i64: 1, 1>, scalar_prefetch = 0 : i64, scratch_operands = 0 : i64, tpu.core_type = #tpu.core_type<tc>, window_params = [{transform_indices = @transform_0, window_bounds = array<i64: 16, 32>}, {transform_indices = @transform_1, window_bounds = array<i64: 16, 32>}, {transform_indices = @transform_2, window_bounds = array<i64: 16, 32>}]} {
    %c0 = arith.constant 0 : index
    %c0_0 = arith.constant 0 : index
    %0 = vector.load %arg2[%c0, %c0_0] : memref<16x32xf32, #tpu.memory_space<vmem>>, vector<16x32xf32>
    %c0_1 = arith.constant 0 : index
    %c0_2 = arith.constant 0 : index
    %1 = vector.load %arg3[%c0_1, %c0_2] : memref<16x32xf32, #tpu.memory_space<vmem>>, vector<16x32xf32>
    %2 = arith.addf %0, %1 : vector<16x32xf32>
    %c0_3 = arith.constant 0 : index
    %c0_4 = arith.constant 0 : index
    %3 = vector.load %arg4[%c0_3, %c0_4] : memref<16x32xf32, #tpu.memory_space<vmem>>, vector<16x32xf32>
    tpu.vector_store %arg4[%c0_3, %c0_4], %2 {strides = array<i32>} : memref<16x32xf32, #tpu.memory_space<vmem>>, vector<16x32xf32>,
    return
  }
  func.func @transform_0(%arg0: i32, %arg1: i32) -> (i32, i32) {
    %c0_i32 = arith.constant 0 : i32
    return %arg1, %arg0 : i32, i32
  }
  func.func @transform_1(%arg0: i32, %arg1: i32) -> (i32, i32) {
    %c0_i32 = arith.constant 0 : i32
    %c0_i32_0 = arith.constant 0 : i32
    return %c0_i32, %arg0 : i32, i32
  }
  func.func @transform_2(%arg0: i32, %arg1: i32) -> (i32, i32) {
    %c0_i32 = arith.constant 0 : i32
    return %arg1, %arg0 : i32, i32
  }
}

</mosaic_0001>

<llo_original>
// kernel: tpu_custom_call.1
$region0: #{tpu_custom_call.1}
  #allocation0 [shape = 'u32[]', space=smem, size = 0x4, offset = 0x4, fixed_abs, tag = 'smem constant byte address 0x4 - core index']
  #allocation1 [shape = 'u32[144,128]{1,0:T(1,128)}', space=vmem, size = 0x12000, scoped, tag = 'internal scratch']
  %s0 = inlined_call_operand.hbm [shape: f32[16,32], index: 0, kind: input, shape index: {}]
  %s1 = inlined_call_operand.hbm [shape: f32[16,32], index: 1, kind: input, shape index: {}]
  %s2 = inlined_call_operand.hbm [shape: f32[16,32], index: 2, kind: output, shape index: {}]
  %s3 = sld [smem:[#allocation0]]
  $region26: #{tpu_custom_call.1} parent=0
    _
  %s5 = ssub.s32 1, %s3
  %s6 = scalar_select 0, %s5, %s3
  $region1: #{tpu_custom_call.1} parent=0
    #allocation2 [shape = 'u8[8192]{0}', space=vmem, size = 0x2000, scoped, tag = 'input window, operand 0, single buffered']
    #allocation3 [shape = 's32[1]{0}', space=sflag, size = 0x4, scoped, tag = 'scoped memory for tpu_custom_call.1']
    #allocation4 [shape = 's32[1]{0}', space=sflag, size = 0x4, scoped, tag = 'scoped memory for tpu_custom_call.1']
    #allocation5 [shape = 'u8[8192]{0}', space=vmem, size = 0x2000, scoped, tag = 'input window, operand 1, single buffered']
    #allocation6 [shape = 's32[1]{0}', space=sflag, size = 0x4, scoped, tag = 'scoped memory for tpu_custom_call.1']
    #allocation7 [shape = 'u8[8192]{0}', space=vmem, size = 0x2000, scoped, tag = 'output window, operand 0, single buffered']
    %7 = vsyncpa [#allocation3], 0
    %8 = vsyncpa [#allocation6], 0
    %9 = vsyncpa [#allocation4], 0
    // Predicated region
    $region2: #{tpu_custom_call.1} parent=1 // pred_check
      _
    $region3: #{tpu_custom_call.1} parent=1 // pred_check_branch
      %11 = sbr.rel (0) target = $region5
    $region4: #{tpu_custom_call.1} parent=1 // pred_region
      %s13 = ssub.s32 256, 256
      %14 = vsyncadd [#allocation3], %s13
      %s15 = sshll.u32 [#allocation2], 4
      %s16 = int_to_ptr.vmem [resolvable:$true] %s15
      %21 = dma.hbm_to_vmem [thread:$0]  %s0, 256, %s16, [#allocation3], 128, 128, 8
    $region5: #{tpu_custom_call.1} parent=1 // pred_fallthru
      _
    // Predicated region
    $region6: #{tpu_custom_call.1} parent=1 // pred_check
      _
    $region7: #{tpu_custom_call.1} parent=1 // pred_check_branch
      %23 = sbr.rel (0) target = $region9
    $region8: #{tpu_custom_call.1} parent=1 // pred_region
      %s25 = ssub.s32 256, 256
      %26 = vsyncadd [#allocation6], %s25
      %s27 = sshll.u32 [#allocation5], 4
      %s28 = int_to_ptr.vmem [resolvable:$true] %s27
      %33 = dma.hbm_to_vmem [thread:$0]  %s1, 256, %s28, [#allocation6], 128, 128, 8
    $region9: #{tpu_custom_call.1} parent=1 // pred_fallthru
      _
    // Predicated region
    $region10: #{tpu_custom_call.1} parent=1 // pred_check
      _
    $region11: #{tpu_custom_call.1} parent=1 // pred_check_branch
      %35 = sbr.rel (0) target = $region13
    $region12: #{tpu_custom_call.1} parent=1 // pred_region
      %36 = dma.done [#allocation3], 256
    $region13: #{tpu_custom_call.1} parent=1 // pred_fallthru
      _
    // Predicated region
    $region14: #{tpu_custom_call.1} parent=1 // pred_check
      _
    $region15: #{tpu_custom_call.1} parent=1 // pred_check_branch
      %38 = sbr.rel (0) target = $region17
    $region16: #{tpu_custom_call.1} parent=1 // pred_region
      %39 = dma.done [#allocation6], 256
    $region17: #{tpu_custom_call.1} parent=1 // pred_fallthru
      _
    %v40 = vld [vmem:[#allocation2] sm:$0xff]
    %v41 = vld [vmem:[#allocation2 + $0x8] sm:$0xff]
    %v42 = vld [vmem:[#allocation5] sm:$0xff]
    %v43 = vld [vmem:[#allocation5 + $0x8] sm:$0xff]
    %v44 = vadd.f32 %v40, %v42
    %v45 = vadd.f32 %v41, %v43
    %vm46 = vcmask 261120
    %47 = vst.msk [vmem:[#allocation7] sm:$0xff] %vm46, %v44
    %48 = vst.msk [vmem:[#allocation7 + $0x8] sm:$0xff] %vm46, %v45
    // Predicated region
    $region18: #{tpu_custom_call.1} parent=1 // pred_check
      _
    $region19: #{tpu_custom_call.1} parent=1 // pred_check_branch
      %50 = sbr.rel (0) target = $region21
    $region20: #{tpu_custom_call.1} parent=1 // pred_region
      %s52 = ssub.s32 256, 256
      %53 = vsyncadd [#allocation4], %s52
      %s54 = sshll.u32 [#allocation7], 4
      %s55 = int_to_ptr.vmem [resolvable:$true] %s54
      %60 = dma.vmem_to_hbm [thread:$0]  %s55, 256, %s2, [#allocation4], 128, 128, 8
    $region21: #{tpu_custom_call.1} parent=1 // pred_fallthru
      _
    // Predicated region
    $region22: #{tpu_custom_call.1} parent=1 // pred_check
      _
    $region23: #{tpu_custom_call.1} parent=1 // pred_check_branch
      %62 = sbr.rel (0) target = $region25
    $region24: #{tpu_custom_call.1} parent=1 // pred_region
      %63 = dma.done [#allocation4], 256
    $region25: #{tpu_custom_call.1} parent=1 // pred_fallthru
      _
    %64 = vsyncpa [#allocation3], 1
    %65 = vsyncpa [#allocation6], 1
    %66 = vsyncpa [#allocation4], 1

</llo_original>
